<compile_context>
chip_gen: v7x
topology: tpu7x:2x2x1
jax: 0.10.0
libtpu: 0.0.40
codegen_flags: <defaults>
</compile_context>

<pallas_src>
import functools

import jax
import jax.numpy as jnp
from jax.experimental import pallas as pl
from jax.experimental.pallas import tpu as pltpu

_LANE = 128


def _round_up(x, m):
    return (x + m - 1) // m * m


def _constrain_kernel(x_ref, w1_ref, b1_ref, w2_ref, b2_ref, w3_ref, b3_ref,
                      o_ref):
    # Cast the streamed f32 obs tile to the weight dtype in-kernel (free VPU
    # pack when weights are bf16; no-op for f32 weights).
    x = x_ref[...].astype(w1_ref.dtype)                          # (TB, D_obs)
    # FC1 + relu  (MXU accumulates in f32; elementwise stays f32)
    h1 = jnp.dot(x, w1_ref[...], preferred_element_type=jnp.float32)
    h1 = jnp.maximum(h1 + b1_ref[...], 0.0)                      # (TB, 128)
    # FC2 + tanh
    h2 = jnp.dot(h1.astype(w2_ref.dtype), w2_ref[...],
                 preferred_element_type=jnp.float32)
    h2 = jnp.tanh(h2 + b2_ref[...])                              # (TB, 128)
    # FC3 (no activation) — real (narrow) output width, masked lane store.
    y = jnp.dot(h2.astype(w3_ref.dtype), w3_ref[...],
                preferred_element_type=jnp.float32)
    o_ref[...] = (y + b3_ref[...]).astype(o_ref.dtype)           # (TB, A)


def prepare_params(params, compute_dtype=jnp.float32, hidden_pad=_LANE):
    """One-time padding of weights/biases to lane-dense hidden widths.

    Call once and reuse; keeps the per-call forward free of weight
    re-materialization.  compute_dtype applies to the matmul operands only —
    biases (and hence relu/tanh inputs) stay f32.
    """
    cd = jnp.dtype(compute_dtype)
    w1, b1 = params["w1"], params["b1"].reshape(1, -1)
    w2, b2 = params["w2"], params["b2"].reshape(1, -1)
    w3, b3 = params["w3"], params["b3"].reshape(1, -1)
    D, H1 = w1.shape
    H2 = w2.shape[1]
    A = w3.shape[1]
    HP = hidden_pad

    w1p = jnp.zeros((D, HP), cd).at[:, :H1].set(w1.astype(cd))
    w2p = jnp.zeros((HP, HP), cd).at[:H1, :H2].set(w2.astype(cd))
    w3p = jnp.zeros((HP, A), cd).at[:H2, :].set(w3.astype(cd))
    b1p = jnp.zeros((1, HP), jnp.float32).at[:, :H1].set(b1.astype(jnp.float32))
    b2p = jnp.zeros((1, HP), jnp.float32).at[:, :H2].set(b2.astype(jnp.float32))
    b3p = b3.astype(jnp.float32)                     # (1, A), real width
    return {"w1": w1p, "b1": b1p, "w2": w2p, "b2": b2p, "w3": w3p, "b3": b3p}


@functools.partial(jax.jit, static_argnames=("tile_rows",))
def constrain_forward(obs, padded_params, *, tile_rows=2048):
    """obs: (B, dim_observation) f32. padded_params: output of prepare_params."""
    w1p, b1p = padded_params["w1"], padded_params["b1"]
    w2p, b2p = padded_params["w2"], padded_params["b2"]
    w3p, b3p = padded_params["w3"], padded_params["b3"]

    B, D = obs.shape
    HP = w1p.shape[1]
    A = w3p.shape[1]

    # Batch tile: as large as practical (amortizes per-grid-step overhead),
    # multiple of 8 sublanes, but capped near ceil(B/2) so the grid keeps
    # >= 2 steps and "parallel" can use both TensorCores on v7x.
    tb = max(8, min(tile_rows, _round_up(pl.cdiv(B, 2), 8)))
    grid = (pl.cdiv(B, tb),)
    const = lambda i: (0, 0)      # weights/biases: resident across the grid

    rows = grid[0] * tb
    wbytes = (w1p.size * w1p.dtype.itemsize + w2p.size * w2p.dtype.itemsize
              + w3p.size * w3p.dtype.itemsize
              + (b1p.size + b2p.size + b3p.size) * 4)
    flops = 2 * rows * (D * HP + HP * HP + HP * A)
    bytes_accessed = (B * D * obs.dtype.itemsize      # obs stream (f32, no pad)
                      + B * A * 4                     # narrow f32 output stream
                      + wbytes)                       # resident weights/biases

    out = pl.pallas_call(
        _constrain_kernel,
        out_shape=jax.ShapeDtypeStruct((B, A), jnp.float32),
        grid=grid,
        in_specs=[
            pl.BlockSpec((tb, D), lambda i: (i, 0)),   # obs: streamed
            pl.BlockSpec((D, HP), const),              # w1 (resident)
            pl.BlockSpec((1, HP), const),              # b1
            pl.BlockSpec((HP, HP), const),             # w2
            pl.BlockSpec((1, HP), const),              # b2
            pl.BlockSpec((HP, A), const),              # w3 (real output width)
            pl.BlockSpec((1, A), const),               # b3
        ],
        out_specs=pl.BlockSpec((tb, A), lambda i: (i, 0)),
        compiler_params=pltpu.CompilerParams(
            dimension_semantics=("parallel",)),
        cost_estimate=pl.CostEstimate(
            flops=flops, transcendentals=rows * HP,
            bytes_accessed=bytes_accessed),
    )(obs, w1p, b1p, w2p, b2p, w3p, b3p)

    return out


def init_params(key, dim_observation, dim_action):
    """Deterministic init mirroring nn.Linear's U(-1/sqrt(fan_in), 1/sqrt(fan_in))."""
    hide, hide2 = 12, 6
    keys = jax.random.split(key, 6)

    def linear(kw, kb, fan_in, fan_out):
        bound = 1.0 / jnp.sqrt(jnp.float32(fan_in))
        w = jax.random.uniform(kw, (fan_in, fan_out), jnp.float32,
                               minval=-bound, maxval=bound)
        b = jax.random.uniform(kb, (1, fan_out), jnp.float32,
                               minval=-bound, maxval=bound)
        return w, b

    w1, b1 = linear(keys[0], keys[1], dim_observation, hide)
    w2, b2 = linear(keys[2], keys[3], hide, hide2)
    w3, b3 = linear(keys[4], keys[5], hide2, dim_action)
    return {"w1": w1, "b1": b1, "w2": w2, "b2": b2, "w3": w3, "b3": b3}


def _reference(obs, p):
    h1 = jnp.maximum(obs @ p["w1"] + p["b1"], 0.0)
    h2 = jnp.tanh(h1 @ p["w2"] + p["b2"])
    return h2 @ p["w3"] + p["b3"]


if __name__ == "__main__":
    key = jax.random.PRNGKey(0)
    k_obs, k_params, k_obs2 = jax.random.split(key, 3)

    dim_observation = 16
    dim_action = 4
    params = init_params(k_params, dim_observation, dim_action)

    # One-time weight preparation (padding / dtype), reused across calls.
    padded_f32 = prepare_params(params)
    padded_bf16 = prepare_params(params, compute_dtype=jnp.bfloat16)

    # Small batch (typical per-agent call).
    obs = jax.random.normal(k_obs, (8, dim_observation), jnp.float32)
    out = jax.block_until_ready(constrain_forward(obs, padded_f32))
    ref = _reference(obs, params)
    assert out.shape == (8, dim_action)
    assert jnp.allclose(out, ref, atol=1e-4, rtol=1e-4)

    # Larger, non-tile-multiple batch: exercises the 2-step pipelined grid and
    # the Pallas-handled partial last block (no wrapper pad / slice).
    obs_big = jax.random.normal(k_obs2, (1000, dim_observation), jnp.float32)
    out_big = jax.block_until_ready(constrain_forward(obs_big, padded_f32))
    ref_big = _reference(obs_big, params)
    assert out_big.shape == (1000, dim_action)
    assert jnp.allclose(out_big, ref_big, atol=1e-4, rtol=1e-4)

    # Smaller explicit tile: more grid steps, still a partial last block.
    out_small_tile = jax.block_until_ready(
        constrain_forward(obs_big, padded_f32, tile_rows=256))
    assert jnp.allclose(out_small_tile, ref_big, atol=1e-4, rtol=1e-4)

    # bf16 weights (v5e-friendly MXU path): obs streamed f32 and cast
    # in-kernel; f32 accumulation + f32 bias/relu/tanh.
    out_bf16 = jax.block_until_ready(constrain_forward(obs_big, padded_bf16))
    assert jnp.allclose(out_bf16, ref_big, atol=5e-2, rtol=5e-2)

    print("KERNEL_OK")
</pallas_src>

<mosaic_0001>
module attributes {stable_mosaic.version = 11 : i64} {
  func.func @_constrain_kernel(%arg0: i32, %arg1: memref<8x16xf32, #tpu.memory_space<vmem>>, %arg2: memref<16x128xf32, #tpu.memory_space<vmem>>, %arg3: memref<1x128xf32, #tpu.memory_space<vmem>>, %arg4: memref<128x128xf32, #tpu.memory_space<vmem>>, %arg5: memref<1x128xf32, #tpu.memory_space<vmem>>, %arg6: memref<128x4xf32, #tpu.memory_space<vmem>>, %arg7: memref<1x4xf32, #tpu.memory_space<vmem>>, %arg8: memref<8x4xf32, #tpu.memory_space<vmem>>) attributes {dimension_semantics = [#tpu.dimension_semantics<parallel>], iteration_bounds = array<i64: 1>, scalar_prefetch = 0 : i64, scratch_operands = 0 : i64, tpu.core_type = #tpu.core_type<tc>, window_params = [{transform_indices = @transform_0, window_bounds = array<i64: 8, 16>}, {pipeline_mode = #tpu.pipeline_mode<synchronous>, transform_indices = @transform_1, window_bounds = array<i64: 16, 128>}, {pipeline_mode = #tpu.pipeline_mode<synchronous>, transform_indices = @transform_2, window_bounds = array<i64: 1, 128>}, {pipeline_mode = #tpu.pipeline_mode<synchronous>, transform_indices = @transform_3, window_bounds = array<i64: 128, 128>}, {pipeline_mode = #tpu.pipeline_mode<synchronous>, transform_indices = @transform_4, window_bounds = array<i64: 1, 128>}, {pipeline_mode = #tpu.pipeline_mode<synchronous>, transform_indices = @transform_5, window_bounds = array<i64: 128, 4>}, {pipeline_mode = #tpu.pipeline_mode<synchronous>, transform_indices = @transform_6, window_bounds = array<i64: 1, 4>}, {transform_indices = @transform_7, window_bounds = array<i64: 8, 4>}]} {
    %c0 = arith.constant 0 : index
    %c0_0 = arith.constant 0 : index
    %0 = vector.load %arg1[%c0, %c0_0] : memref<8x16xf32, #tpu.memory_space<vmem>>, vector<8x16xf32>
    %c0_1 = arith.constant 0 : index
    %c0_2 = arith.constant 0 : index
    %1 = vector.load %arg2[%c0_1, %c0_2] : memref<16x128xf32, #tpu.memory_space<vmem>>, vector<16x128xf32>
    %cst = arith.constant dense<0.000000e+00> : vector<8x128xf32>
    %2 = tpu.matmul %0, %1, %cst {dimension_numbers = #tpu.dot_dimension_numbers<[1], [0], [0], [1], [0, 0, 1, 1], [], []>} : vector<8x16xf32>, vector<16x128xf32>, vector<8x128xf32> -> vector<8x128xf32>
    %c0_3 = arith.constant 0 : index
    %c0_4 = arith.constant 0 : index
    %3 = vector.load %arg3[%c0_3, %c0_4] : memref<1x128xf32, #tpu.memory_space<vmem>>, vector<1x128xf32>
    %4 = vector.broadcast %3 : vector<1x128xf32> to vector<8x128xf32>
    %5 = arith.addf %2, %4 : vector<8x128xf32>
    %cst_5 = arith.constant 0.000000e+00 : f32
    %6 = vector.broadcast %cst_5 : f32 to vector<8x128xf32>
    %7 = arith.maximumf %5, %6 : vector<8x128xf32>
    %c0_6 = arith.constant 0 : index
    %c0_7 = arith.constant 0 : index
    %8 = vector.load %arg4[%c0_6, %c0_7] : memref<128x128xf32, #tpu.memory_space<vmem>>, vector<128x128xf32>
    %cst_8 = arith.constant dense<0.000000e+00> : vector<8x128xf32>
    %9 = tpu.matmul %7, %8, %cst_8 {dimension_numbers = #tpu.dot_dimension_numbers<[1], [0], [0], [1], [0, 0, 1, 1], [], []>} : vector<8x128xf32>, vector<128x128xf32>, vector<8x128xf32> -> vector<8x128xf32>
    %c0_9 = arith.constant 0 : index
    %c0_10 = arith.constant 0 : index
    %10 = vector.load %arg5[%c0_9, %c0_10] : memref<1x128xf32, #tpu.memory_space<vmem>>, vector<1x128xf32>
    %11 = vector.broadcast %10 : vector<1x128xf32> to vector<8x128xf32>
    %12 = arith.addf %9, %11 : vector<8x128xf32>
    %13 = math.tanh %12 : vector<8x128xf32>
    %c0_11 = arith.constant 0 : index
    %c0_12 = arith.constant 0 : index
    %14 = vector.load %arg6[%c0_11, %c0_12] : memref<128x4xf32, #tpu.memory_space<vmem>>, vector<128x4xf32>
    %cst_13 = arith.constant dense<0.000000e+00> : vector<8x4xf32>
    %15 = tpu.matmul %13, %14, %cst_13 {dimension_numbers = #tpu.dot_dimension_numbers<[1], [0], [0], [1], [0, 0, 1, 1], [], []>} : vector<8x128xf32>, vector<128x4xf32>, vector<8x4xf32> -> vector<8x4xf32>
    %c0_14 = arith.constant 0 : index
    %c0_15 = arith.constant 0 : index
    %16 = vector.load %arg7[%c0_14, %c0_15] : memref<1x4xf32, #tpu.memory_space<vmem>>, vector<1x4xf32>
    %17 = vector.broadcast %16 : vector<1x4xf32> to vector<8x4xf32>
    %18 = arith.addf %15, %17 : vector<8x4xf32>
    %c0_16 = arith.constant 0 : index
    %c0_17 = arith.constant 0 : index
    %19 = vector.load %arg8[%c0_16, %c0_17] : memref<8x4xf32, #tpu.memory_space<vmem>>, vector<8x4xf32>
    tpu.vector_store %arg8[%c0_16, %c0_17], %18 {strides = array<i32>} : memref<8x4xf32, #tpu.memory_space<vmem>>, vector<8x4xf32>,
    return
  }
  func.func @transform_0(%arg0: i32) -> (i32, i32) {
    %c0_i32 = arith.constant 0 : i32
    %c0_i32_0 = arith.constant 0 : i32
    return %arg0, %c0_i32 : i32, i32
  }
  func.func @transform_1(%arg0: i32) -> (i32, i32) {
    %c0_i32 = arith.constant 0 : i32
    %c0_i32_0 = arith.constant 0 : i32
    %c0_i32_1 = arith.constant 0 : i32
    return %c0_i32, %c0_i32_0 : i32, i32
  }
  func.func @transform_2(%arg0: i32) -> (i32, i32) {
    %c0_i32 = arith.constant 0 : i32
    %c0_i32_0 = arith.constant 0 : i32
    %c0_i32_1 = arith.constant 0 : i32
    return %c0_i32, %c0_i32_0 : i32, i32
  }
  func.func @transform_3(%arg0: i32) -> (i32, i32) {
    %c0_i32 = arith.constant 0 : i32
    %c0_i32_0 = arith.constant 0 : i32
    %c0_i32_1 = arith.constant 0 : i32
    return %c0_i32, %c0_i32_0 : i32, i32
  }
  func.func @transform_4(%arg0: i32) -> (i32, i32) {
    %c0_i32 = arith.constant 0 : i32
    %c0_i32_0 = arith.constant 0 : i32
    %c0_i32_1 = arith.constant 0 : i32
    return %c0_i32, %c0_i32_0 : i32, i32
  }
  func.func @transform_5(%arg0: i32) -> (i32, i32) {
    %c0_i32 = arith.constant 0 : i32
    %c0_i32_0 = arith.constant 0 : i32
    %c0_i32_1 = arith.constant 0 : i32
    return %c0_i32, %c0_i32_0 : i32, i32
  }
  func.func @transform_6(%arg0: i32) -> (i32, i32) {
    %c0_i32 = arith.constant 0 : i32
    %c0_i32_0 = arith.constant 0 : i32
    %c0_i32_1 = arith.constant 0 : i32
    return %c0_i32, %c0_i32_0 : i32, i32
  }
  func.func @transform_7(%arg0: i32) -> (i32, i32) {
    %c0_i32 = arith.constant 0 : i32
    %c0_i32_0 = arith.constant 0 : i32
    return %arg0, %c0_i32 : i32, i32
  }
}

</mosaic_0001>

<llo_original>
// kernel: constrain_forward.1
$region0: #{constrain_forward.1}
  #allocation0 [shape = 'u32[]', space=smem, size = 0x4, offset = 0x4, fixed_abs, tag = 'smem constant byte address 0x4 - core index']
  #allocation1 [shape = 'u32[144,128]{1,0:T(1,128)}', space=vmem, size = 0x12000, scoped, tag = 'internal scratch']
  %s0 = inlined_call_operand.hbm [shape: f32[8,16], index: 0, kind: input, shape index: {}]
  %s1 = inlined_call_operand.vmem [shape: f32[16,128], index: 1, kind: input, shape index: {}]
  %s2 = inlined_call_operand.vmem [shape: f32[1,128], index: 2, kind: input, shape index: {}]
  %s3 = inlined_call_operand.vmem [shape: f32[128,128], index: 3, kind: input, shape index: {}]
  %s4 = inlined_call_operand.vmem [shape: f32[1,128], index: 4, kind: input, shape index: {}]
  %s5 = inlined_call_operand.vmem [shape: f32[128,4], index: 5, kind: input, shape index: {}]
  %s6 = inlined_call_operand.vmem [shape: f32[1,4], index: 6, kind: input, shape index: {}]
  %s7 = inlined_call_operand.vmem [shape: f32[8,4], index: 7, kind: output, shape index: {}]
  %s8 = sld [smem:[#allocation0]]
  $region42: #{constrain_forward.1} parent=0
    _
  %s10 = ssub.s32 1, %s8
  %s11 = scalar_select 0, %s10, %s8
  $region1: #{constrain_forward.1} parent=0
    #allocation2 [shape = 'u8[4096]{0}', space=vmem, size = 0x1000, scoped, tag = 'input window, operand 0, single buffered']
    #allocation3 [shape = 's32[1]{0}', space=sflag, size = 0x4, scoped, tag = 'scoped memory for constrain_forward.1']
    %12 = vsyncpa [#allocation3], 0
    // Predicated region
    $region2: #{constrain_forward.1} parent=1 // pred_check
      _
    $region3: #{constrain_forward.1} parent=1 // pred_check_branch
      %14 = sbr.rel (0) target = $region5
    $region4: #{constrain_forward.1} parent=1 // pred_region
      %s16 = ssub.s32 128, 128
      %17 = vsyncadd [#allocation3], %s16
      %s19 = sshll.u32 [#allocation2], 4
      %s20 = int_to_ptr.vmem [resolvable:$true] %s19
      %22 = dma.hbm_to_vmem [thread:$0]  %s0, 128, %s20, [#allocation3]
    $region5: #{constrain_forward.1} parent=1 // pred_fallthru
      _
    // Predicated region
    $region6: #{constrain_forward.1} parent=1 // pred_check
      _
    $region7: #{constrain_forward.1} parent=1 // pred_check_branch
      %24 = sbr.rel (0) target = $region9
    $region8: #{constrain_forward.1} parent=1 // pred_region
      _
    $region9: #{constrain_forward.1} parent=1 // pred_fallthru
      _
    // Predicated region
    $region10: #{constrain_forward.1} parent=1 // pred_check
      _
    $region11: #{constrain_forward.1} parent=1 // pred_check_branch
      %26 = sbr.rel (0) target = $region13
    $region12: #{constrain_forward.1} parent=1 // pred_region
      _
    $region13: #{constrain_forward.1} parent=1 // pred_fallthru
      _
    // Predicated region
    $region14: #{constrain_forward.1} parent=1 // pred_check
      _
    $region15: #{constrain_forward.1} parent=1 // pred_check_branch
      %28 = sbr.rel (0) target = $region17
    $region16: #{constrain_forward.1} parent=1 // pred_region
      _
    $region17: #{constrain_forward.1} parent=1 // pred_fallthru
      _
    // Predicated region
    $region18: #{constrain_forward.1} parent=1 // pred_check
      _
    $region19: #{constrain_forward.1} parent=1 // pred_check_branch
      %30 = sbr.rel (0) target = $region21
    $region20: #{constrain_forward.1} parent=1 // pred_region
      _
    $region21: #{constrain_forward.1} parent=1 // pred_fallthru
      _
    // Predicated region
    $region22: #{constrain_forward.1} parent=1 // pred_check
      _
    $region23: #{constrain_forward.1} parent=1 // pred_check_branch
      %32 = sbr.rel (0) target = $region25
    $region24: #{constrain_forward.1} parent=1 // pred_region
      _
    $region25: #{constrain_forward.1} parent=1 // pred_fallthru
      _
    // Predicated region
    $region26: #{constrain_forward.1} parent=1 // pred_check
      _
    $region27: #{constrain_forward.1} parent=1 // pred_check_branch
      %34 = sbr.rel (0) target = $region29
    $region28: #{constrain_forward.1} parent=1 // pred_region
      _
    $region29: #{constrain_forward.1} parent=1 // pred_fallthru
      _
    // Predicated region
    $region30: #{constrain_forward.1} parent=1 // pred_check
      _
    $region31: #{constrain_forward.1} parent=1 // pred_check_branch
      %36 = sbr.rel (0) target = $region33
    $region32: #{constrain_forward.1} parent=1 // pred_region
      %37 = dma.done [#allocation3], 128
    $region33: #{constrain_forward.1} parent=1 // pred_fallthru
      _
    %v38 = vld [vmem:[#allocation2] sm:$0xff]
    %v39 = vld [vmem:[%s1] sm:$0xff]
    %v40 = vld [vmem:[%s1 + $0x8] sm:$0xff]
    %v41 = vld [vmem:[%s2] sm:$0x1]
    %v43 = vlaneseq
    %v44 = vshrl.u32 %v43, 7
    %v45 = vsub.s32 0, %v44
    %v46 = vrot.slane %v41, %v45
    %vm48 = vcmask 130048
    %v50 = vsel %vm48, %v38, 0
    %52 = vmatprep.subr.mxu0 0.0
    %53 = vmatpush1.msra.mxu0 %v39
    %54 = vmatprep.subr.mxu0 0.0
    %55 = vmatpush1.msra.mxu0 %v40
    %56 = vmatprep.subr.mxu0 0.0
    %57 = vmatpush1.msra.mxu0 0.0
    %58 = vmatprep.subr.mxu0 0.0
    %59 = vmatpush1.msra.mxu0 0.0
    %60 = vmatprep.subr.mxu0 0.0
    %61 = vmatpush1.msra.mxu0 0.0
    %62 = vmatprep.subr.mxu0 0.0
    %63 = vmatpush1.msra.mxu0 0.0
    %64 = vmatprep.subr.mxu0 0.0
    %65 = vmatpush1.msra.mxu0 0.0
    %66 = vmatprep.subr.mxu0 0.0
    %67 = vmatpush1.msra.mxu0 0.0
    %68 = vmatprep.subr.mxu0 0.0
    %69 = vmatpush1.msra.mxu0 0.0
    %70 = vmatprep.subr.mxu0 0.0
    %71 = vmatpush1.msra.mxu0 0.0
    %72 = vmatprep.subr.mxu0 0.0
    %73 = vmatpush1.msra.mxu0 0.0
    %74 = vmatprep.subr.mxu0 0.0
    %75 = vmatpush1.msra.mxu0 0.0
    %76 = vmatprep.subr.mxu0 0.0
    %77 = vmatpush1.msra.mxu0 0.0
    %78 = vmatprep.subr.mxu0 0.0
    %79 = vmatpush1.msra.mxu0 0.0
    %80 = vmatprep.subr.mxu0 0.0
    %81 = vmatpush1.msra.mxu0 0.0
    %82 = vmatprep.subr.mxu0 0.0
    %83 = vmatpush1.msra.mxu0 0.0
    %84 = vmatprep.subr.mxu0 0.0
    %85 = vmatpush1.msra.mxu0 0.0
    %86 = vmatprep.subr.mxu0 0.0
    %87 = vmatpush1.msra.mxu0 0.0
    %88 = vmatprep.subr.mxu0 0.0
    %89 = vmatpush1.msra.mxu0 0.0
    %90 = vmatprep.subr.mxu0 0.0
    %91 = vmatpush1.msra.mxu0 0.0
    %92 = vmatprep.subr.mxu0 0.0
    %93 = vmatpush1.msra.mxu0 0.0
    %94 = vmatprep.subr.mxu0 0.0
    %95 = vmatpush1.msra.mxu0 0.0
    %96 = vmatprep.subr.mxu0 0.0
    %97 = vmatpush1.msra.mxu0 0.0
    %98 = vmatprep.subr.mxu0 0.0
    %99 = vmatpush1.msra.mxu0 0.0
    %100 = vmatprep.subr.mxu0 0.0
    %101 = vmatpush1.msra.mxu0 0.0
    %102 = vmatprep.subr.mxu0 0.0
    %103 = vmatpush1.msra.mxu0 0.0
    %104 = vmatprep.subr.mxu0 0.0
    %105 = vmatpush1.msra.mxu0 0.0
    %106 = vmatprep.subr.mxu0 0.0
    %107 = vmatpush1.msra.mxu0 0.0
    %108 = vmatprep.subr.mxu0 0.0
    %109 = vmatpush1.msra.mxu0 0.0
    %110 = vmatprep.subr.mxu0 0.0
    %111 = vmatpush1.msra.mxu0 0.0
    %112 = vmatprep.subr.mxu0 0.0
    %113 = vmatpush1.msra.mxu0 0.0
    %114 = vmatprep.subr.mxu0 0.0
    %115 = vmatpush1.msra.mxu0 0.0
    %116 = vmatprep.mubr.f32.mxu0 0.0
    %117 = vmatmul.mubr.f32.gmra.mrb[0].mxu0 %v50
    %v118 = vpop.f32.mrb[0].mxu0
    %v119 = vadd.f32 %v46, %v118
    %v120 = vpop.f32.mrb[0].mxu0
    %121 = vdwg.mxu0
    %v122 = vmax.f32 %v119, 0.0
    %v123 = vld [vmem:[%s3] sm:$0xff]
    %v124 = vld [vmem:[%s3 + $0x8] sm:$0xff]
    %v125 = vld [vmem:[%s3 + $0x10] sm:$0xff]
    %v126 = vld [vmem:[%s3 + $0x18] sm:$0xff]
    %v127 = vld [vmem:[%s3 + $0x20] sm:$0xff]
    %v128 = vld [vmem:[%s3 + $0x28] sm:$0xff]
    %v129 = vld [vmem:[%s3 + $0x30] sm:$0xff]
    %v130 = vld [vmem:[%s3 + $0x38] sm:$0xff]
    %v131 = vld [vmem:[%s3 + $0x40] sm:$0xff]
    %v132 = vld [vmem:[%s3 + $0x48] sm:$0xff]
    %v133 = vld [vmem:[%s3 + $0x50] sm:$0xff]
    %v134 = vld [vmem:[%s3 + $0x58] sm:$0xff]
    %v135 = vld [vmem:[%s3 + $0x60] sm:$0xff]
    %v136 = vld [vmem:[%s3 + $0x68] sm:$0xff]
    %v137 = vld [vmem:[%s3 + $0x70] sm:$0xff]
    %v138 = vld [vmem:[%s3 + $0x78] sm:$0xff]
    %v139 = vld [vmem:[%s4] sm:$0x1]
    %v141 = vlaneseq
    %v142 = vshrl.u32 %v141, 7
    %v143 = vsub.s32 0, %v142
    %v144 = vrot.slane %v139, %v143
    %146 = vmatprep.subr.mxu0 0.0
    %147 = vmatpush1.msra.mxu0 %v123
    %148 = vmatprep.subr.mxu0 0.0
    %149 = vmatpush1.msra.mxu0 %v124
    %150 = vmatprep.subr.mxu0 0.0
    %151 = vmatpush1.msra.mxu0 %v125
    %152 = vmatprep.subr.mxu0 0.0
    %153 = vmatpush1.msra.mxu0 %v126
    %154 = vmatprep.subr.mxu0 0.0
    %155 = vmatpush1.msra.mxu0 %v127
    %156 = vmatprep.subr.mxu0 0.0
    %157 = vmatpush1.msra.mxu0 %v128
    %158 = vmatprep.subr.mxu0 0.0
    %159 = vmatpush1.msra.mxu0 %v129
    %160 = vmatprep.subr.mxu0 0.0
    %161 = vmatpush1.msra.mxu0 %v130
    %162 = vmatprep.subr.mxu0 0.0
    %163 = vmatpush1.msra.mxu0 %v131
    %164 = vmatprep.subr.mxu0 0.0
    %165 = vmatpush1.msra.mxu0 %v132
    %166 = vmatprep.subr.mxu0 0.0
    %167 = vmatpush1.msra.mxu0 %v133
    %168 = vmatprep.subr.mxu0 0.0
    %169 = vmatpush1.msra.mxu0 %v134
    %170 = vmatprep.subr.mxu0 0.0
    %171 = vmatpush1.msra.mxu0 %v135
    %172 = vmatprep.subr.mxu0 0.0
    %173 = vmatpush1.msra.mxu0 %v136
    %174 = vmatprep.subr.mxu0 0.0
    %175 = vmatpush1.msra.mxu0 %v137
    %176 = vmatprep.subr.mxu0 0.0
    %177 = vmatpush1.msra.mxu0 %v138
    %178 = vmatprep.subr.mxu0 0.0
    %179 = vmatpush1.msra.mxu0 0.0
    %180 = vmatprep.subr.mxu0 0.0
    %181 = vmatpush1.msra.mxu0 0.0
    %182 = vmatprep.subr.mxu0 0.0
    %183 = vmatpush1.msra.mxu0 0.0
    %184 = vmatprep.subr.mxu0 0.0
    %185 = vmatpush1.msra.mxu0 0.0
    %186 = vmatprep.subr.mxu0 0.0
    %187 = vmatpush1.msra.mxu0 0.0
    %188 = vmatprep.subr.mxu0 0.0
    %189 = vmatpush1.msra.mxu0 0.0
    %190 = vmatprep.subr.mxu0 0.0
    %191 = vmatpush1.msra.mxu0 0.0
    %192 = vmatprep.subr.mxu0 0.0
    %193 = vmatpush1.msra.mxu0 0.0
    %194 = vmatprep.subr.mxu0 0.0
    %195 = vmatpush1.msra.mxu0 0.0
    %196 = vmatprep.subr.mxu0 0.0
    %197 = vmatpush1.msra.mxu0 0.0
    %198 = vmatprep.subr.mxu0 0.0
    %199 = vmatpush1.msra.mxu0 0.0
    %200 = vmatprep.subr.mxu0 0.0
    %201 = vmatpush1.msra.mxu0 0.0
    %202 = vmatprep.subr.mxu0 0.0
    %203 = vmatpush1.msra.mxu0 0.0
    %204 = vmatprep.subr.mxu0 0.0
    %205 = vmatpush1.msra.mxu0 0.0
    %206 = vmatprep.subr.mxu0 0.0
    %207 = vmatpush1.msra.mxu0 0.0
    %208 = vmatprep.subr.mxu0 0.0
    %209 = vmatpush1.msra.mxu0 0.0
    %210 = vmatprep.mubr.f32.mxu0 0.0
    %211 = vmatmul.mubr.f32.gmra.mrb[0].mxu0 %v122
    %v212 = vpop.f32.mrb[0].mxu0
    %v213 = vadd.f32 %v144, %v212
    %v214 = vpop.f32.mrb[0].mxu0
    %215 = vdwg.mxu0
    %v216 = vtanh.pop %v213
    %v217 = vld [vmem:[%s5] sm:$0xff]
    %v218 = vld [vmem:[%s5 + $0x8] sm:$0xff]
    %v219 = vld [vmem:[%s5 + $0x10] sm:$0xff]
    %v220 = vld [vmem:[%s5 + $0x18] sm:$0xff]
    %v221 = vld [vmem:[%s5 + $0x20] sm:$0xff]
    %v222 = vld [vmem:[%s5 + $0x28] sm:$0xff]
    %v223 = vld [vmem:[%s5 + $0x30] sm:$0xff]
    %v224 = vld [vmem:[%s5 + $0x38] sm:$0xff]
    %v225 = vld [vmem:[%s5 + $0x40] sm:$0xff]
    %v226 = vld [vmem:[%s5 + $0x48] sm:$0xff]
    %v227 = vld [vmem:[%s5 + $0x50] sm:$0xff]
    %v228 = vld [vmem:[%s5 + $0x58] sm:$0xff]
    %v229 = vld [vmem:[%s5 + $0x60] sm:$0xff]
    %v230 = vld [vmem:[%s5 + $0x68] sm:$0xff]
    %v231 = vld [vmem:[%s5 + $0x70] sm:$0xff]
    %v232 = vld [vmem:[%s5 + $0x78] sm:$0xff]
    %v233 = vld [vmem:[%s6] sm:$0x1]
    %v235 = vlaneseq
    %v236 = vshrl.u32 %v235, 7
    %v237 = vsub.s32 0, %v236
    %v238 = vrot.slane %v233, %v237
    %240 = vmatprep.subr.mxu0 0.0
    %241 = vmatpush1.msra.mxu0 %v217
    %242 = vmatprep.subr.mxu0 0.0
    %243 = vmatpush1.msra.mxu0 %v218
    %244 = vmatprep.subr.mxu0 0.0
    %245 = vmatpush1.msra.mxu0 %v219
    %246 = vmatprep.subr.mxu0 0.0
    %247 = vmatpush1.msra.mxu0 %v220
    %248 = vmatprep.subr.mxu0 0.0
    %249 = vmatpush1.msra.mxu0 %v221
    %250 = vmatprep.subr.mxu0 0.0
    %251 = vmatpush1.msra.mxu0 %v222
    %252 = vmatprep.subr.mxu0 0.0
    %253 = vmatpush1.msra.mxu0 %v223
    %254 = vmatprep.subr.mxu0 0.0
    %255 = vmatpush1.msra.mxu0 %v224
    %256 = vmatprep.subr.mxu0 0.0
    %257 = vmatpush1.msra.mxu0 %v225
    %258 = vmatprep.subr.mxu0 0.0
    %259 = vmatpush1.msra.mxu0 %v226
    %260 = vmatprep.subr.mxu0 0.0
    %261 = vmatpush1.msra.mxu0 %v227
    %262 = vmatprep.subr.mxu0 0.0
    %263 = vmatpush1.msra.mxu0 %v228
    %264 = vmatprep.subr.mxu0 0.0
    %265 = vmatpush1.msra.mxu0 %v229
    %266 = vmatprep.subr.mxu0 0.0
    %267 = vmatpush1.msra.mxu0 %v230
    %268 = vmatprep.subr.mxu0 0.0
    %269 = vmatpush1.msra.mxu0 %v231
    %270 = vmatprep.subr.mxu0 0.0
    %271 = vmatpush1.msra.mxu0 %v232
    %272 = vmatprep.subr.mxu0 0.0
    %273 = vmatpush1.msra.mxu0 0.0
    %274 = vmatprep.subr.mxu0 0.0
    %275 = vmatpush1.msra.mxu0 0.0
    %276 = vmatprep.subr.mxu0 0.0
    %277 = vmatpush1.msra.mxu0 0.0
    %278 = vmatprep.subr.mxu0 0.0
    %279 = vmatpush1.msra.mxu0 0.0
    %280 = vmatprep.subr.mxu0 0.0
    %281 = vmatpush1.msra.mxu0 0.0
    %282 = vmatprep.subr.mxu0 0.0
    %283 = vmatpush1.msra.mxu0 0.0
    %284 = vmatprep.subr.mxu0 0.0
    %285 = vmatpush1.msra.mxu0 0.0
    %286 = vmatprep.subr.mxu0 0.0
    %287 = vmatpush1.msra.mxu0 0.0
    %288 = vmatprep.subr.mxu0 0.0
    %289 = vmatpush1.msra.mxu0 0.0
    %290 = vmatprep.subr.mxu0 0.0
    %291 = vmatpush1.msra.mxu0 0.0
    %292 = vmatprep.subr.mxu0 0.0
    %293 = vmatpush1.msra.mxu0 0.0
    %294 = vmatprep.subr.mxu0 0.0
    %295 = vmatpush1.msra.mxu0 0.0
    %296 = vmatprep.subr.mxu0 0.0
    %297 = vmatpush1.msra.mxu0 0.0
    %298 = vmatprep.subr.mxu0 0.0
    %299 = vmatpush1.msra.mxu0 0.0
    %300 = vmatprep.subr.mxu0 0.0
    %301 = vmatpush1.msra.mxu0 0.0
    %302 = vmatprep.subr.mxu0 0.0
    %303 = vmatpush1.msra.mxu0 0.0
    %304 = vmatprep.mubr.f32.mxu0 0.0
    %305 = vmatmul.mubr.f32.gmra.mrb[0].mxu0 %v216
    %v306 = vpop.f32.mrb[0].mxu0
    %v307 = vadd.f32 %v238, %v306
    %v308 = vpop.f32.mrb[0].mxu0
    %309 = vdwg.mxu0
    %vm310 = vcmask 31744
    %311 = vst.msk [vmem:[%s7] sm:$0xff] %vm310, %v307
    // Predicated region
    $region34: #{constrain_forward.1} parent=1 // pred_check
      _
    $region35: #{constrain_forward.1} parent=1 // pred_check_branch
      %313 = sbr.rel (0) target = $region37
    $region36: #{constrain_forward.1} parent=1 // pred_region
      _
    $region37: #{constrain_forward.1} parent=1 // pred_fallthru
      _
    // Predicated region
    $region38: #{constrain_forward.1} parent=1 // pred_check
      _
    $region39: #{constrain_forward.1} parent=1 // pred_check_branch
      %315 = sbr.rel (0) target = $region41
    $region40: #{constrain_forward.1} parent=1 // pred_region
      _
    $region41: #{constrain_forward.1} parent=1 // pred_fallthru
      _
    %316 = vsyncpa [#allocation3], 1

</llo_original>
